<compile_context>
chip_gen: v6e
topology: v6e:2x2x1
jax: 0.10.0
libtpu: 0.0.40
codegen_flags: <defaults>
</compile_context>

<pallas_src>
import math

import jax
import jax.numpy as jnp
from jax import lax
from jax.experimental import pallas as pl
from jax.experimental.pallas import tpu as pltpu

D_MODEL = 768
D_INNER = 4 * D_MODEL          # 3072
N_HEADS = 1
D_K = D_MODEL // N_HEADS       # 768 (single head -> no head reshape needed)
LN_EPS = 1e-6                  # matches nn.LayerNorm(d_model, eps=1e-06)
INV_TEMP = 1.0 / math.sqrt(D_K)
FFN_CHUNK = 1024               # d_inner processed in 3 slabs of 1024


def _layer_norm(x, gamma, beta):
    mu = jnp.mean(x, axis=-1, keepdims=True)
    var = jnp.mean(jnp.square(x - mu), axis=-1, keepdims=True)
    return (x - mu) * lax.rsqrt(var + LN_EPS) * gamma + beta


# ---------------------------------------------------------------------------
# Fused TransformerBlock kernel:
#   QKV proj -> masked softmax attention -> out proj -> add&LN -> FFN -> add&LN
# Runs once (no grid); all operands live in VMEM, single-buffered.
# ---------------------------------------------------------------------------
def _make_block_kernel(batch, seq_len, text_length):
    rows_x = tuple(b * seq_len for b in range(batch))                 # att_output[:, 0]
    rows_y = tuple(b * seq_len + text_length for b in range(batch))   # att_output[:, text_length]

    def kernel(x_ref, mask_ref,
               wqkv_ref, sqkv_ref, wo_ref, so_ref, g1_ref, be1_ref,
               w1_ref, s1_ref, b1_ref, w2_ref, s2_ref, b2_ref,
               g2_ref, be2_ref,
               ox_ref, oy_ref):
        x = x_ref[...]                                  # (S, D) f32, S = batch*seq_len
        mask = mask_ref[...]                            # (S, S) additive f32 (block-diag)

        # --- fused QKV projection (int8 weight -> f32 cast is exact; scale on acc) ---
        wqkv = wqkv_ref[...].astype(jnp.float32)        # (D, 3D)
        qkv = jnp.dot(x, wqkv, preferred_element_type=jnp.float32) * sqkv_ref[...]
        q = qkv[:, 0:D_MODEL]                           # 1/sqrt(d_k) folded into q scale
        k = qkv[:, D_MODEL:2 * D_MODEL]
        v = qkv[:, 2 * D_MODEL:3 * D_MODEL]

        # q @ k^T (contract last axes directly), + mask, softmax in f32
        s = lax.dot_general(q, k, (((1,), (1,)), ((), ())),
                            preferred_element_type=jnp.float32)       # (S, S)
        s = s + mask
        s = s - jnp.max(s, axis=-1, keepdims=True)
        p = jnp.exp(s)
        p = p * pl.reciprocal(jnp.sum(p, axis=-1, keepdims=True), approx=True)

        ctx = jnp.dot(p, v, preferred_element_type=jnp.float32)       # (S, D)
        attn = jnp.dot(ctx, wo_ref[...].astype(jnp.float32),
                       preferred_element_type=jnp.float32) * so_ref[...]

        h1 = _layer_norm(x + attn, g1_ref[...], be1_ref[...])         # (S, D) f32

        # --- position-wise FFN, chunked over d_inner (bounds live f32 temporaries) ---
        acc = jnp.zeros((x.shape[0], D_MODEL), jnp.float32)
        for c in range(D_INNER // FFN_CHUNK):
            lo = c * FFN_CHUNK
            hi = lo + FFN_CHUNK
            hc = jnp.dot(h1, w1_ref[:, lo:hi].astype(jnp.float32),
                         preferred_element_type=jnp.float32)
            hc = hc * s1_ref[:, lo:hi] + b1_ref[:, lo:hi]
            hc = jnp.maximum(hc, 0.0)                                  # ReLU
            acc = acc + jnp.dot(hc, w2_ref[lo:hi, :].astype(jnp.float32),
                                preferred_element_type=jnp.float32)
        y = acc * s2_ref[...] + b2_ref[...]                            # w2 scale is per-column

        out = _layer_norm(h1 + y, g2_ref[...], be2_ref[...])           # (S, D)

        # Emit only the rows consumed downstream.
        ox_ref[...] = jnp.concatenate([out[r:r + 1, :] for r in rows_x], axis=0)
        oy_ref[...] = jnp.concatenate([out[r:r + 1, :] for r in rows_y], axis=0)

    return kernel


def fused_transformer_block(x_flat, mask_full, p, batch, seq_len, text_length):
    kernel = _make_block_kernel(batch, seq_len, text_length)
    args = (x_flat, mask_full,
            p["wqkv_q"], p["wqkv_s"], p["wo_q"], p["wo_s"],
            p["ln1_g"], p["ln1_b"],
            p["w1_q"], p["w1_s"], p["b1"],
            p["w2_q"], p["w2_s"], p["b2"],
            p["ln2_g"], p["ln2_b"])
    vmem = lambda: pl.BlockSpec(memory_space=pltpu.MemorySpace.VMEM)
    return pl.pallas_call(
        kernel,
        out_shape=(jax.ShapeDtypeStruct((batch, D_MODEL), jnp.float32),   # x rows
                   jax.ShapeDtypeStruct((batch, D_MODEL), jnp.float32)),  # y rows
        in_specs=[vmem() for _ in args],
        out_specs=(vmem(), vmem()),
        compiler_params=pltpu.CompilerParams(
            # ~7 MiB int8 weights (single-buffered, no grid) + f32 dequant temporaries;
            # explicit because v5e's scoped default is only 16 MiB; fits v7x's 64 MiB.
            vmem_limit_bytes=40 * 1024 * 1024,
        ),
    )(*args)


# ---------------------------------------------------------------------------
# Parameter initialization (deterministic, synthetic).  Linear weights are stored
# kernel-ready: transposed to (in_features, out_features), wq/wk/wv fused into one
# (D, 3D) matrix with 1/sqrt(d_k) folded into wq, then symmetrically quantized to
# int8 with per-output-channel f32 scales.  Biases / LayerNorm params stay f32.
# ---------------------------------------------------------------------------
def _quantize_cols(w_t):
    """Symmetric per-output-channel int8 quantization of a (in, out) matrix."""
    s = jnp.max(jnp.abs(w_t), axis=0, keepdims=True) / 127.0
    s = jnp.maximum(s, 1e-8)
    q = jnp.clip(jnp.round(w_t / s), -127.0, 127.0).astype(jnp.int8)
    return q, s.astype(jnp.float32)


def init_params(key):
    ks = jax.random.split(key, 8)
    scale = 0.02

    def lin_w(k, out_f, in_f):      # nn.Linear weight (out, in) -> (in, out)
        return (jax.random.normal(k, (out_f, in_f), jnp.float32) * scale).T

    wq_t = lin_w(ks[0], D_MODEL, D_MODEL) * INV_TEMP   # fold 1/sqrt(d_k) offline
    wk_t = lin_w(ks[1], D_MODEL, D_MODEL)
    wv_t = lin_w(ks[2], D_MODEL, D_MODEL)
    wqkv_q, wqkv_s = _quantize_cols(jnp.concatenate([wq_t, wk_t, wv_t], axis=1))
    wo_q, wo_s = _quantize_cols(lin_w(ks[3], D_MODEL, D_MODEL))
    w1_q, w1_s = _quantize_cols(lin_w(ks[4], D_INNER, D_MODEL))
    w2_q, w2_s = _quantize_cols(lin_w(ks[6], D_MODEL, D_INNER))

    return {
        "wqkv_q": wqkv_q, "wqkv_s": wqkv_s,            # (768, 2304) i8, (1, 2304) f32
        "wo_q": wo_q, "wo_s": wo_s,                    # (768, 768)  i8, (1, 768)  f32
        "ln1_g": jnp.ones((1, D_MODEL), jnp.float32),
        "ln1_b": jnp.zeros((1, D_MODEL), jnp.float32),
        "w1_q": w1_q, "w1_s": w1_s,                    # (768, 3072) i8, (1, 3072) f32
        "b1": jax.random.normal(ks[5], (1, D_INNER), jnp.float32) * scale,
        "w2_q": w2_q, "w2_s": w2_s,                    # (3072, 768) i8, (1, 768)  f32
        "b2": jax.random.normal(ks[7], (1, D_MODEL), jnp.float32) * scale,
        "ln2_g": jnp.ones((1, D_MODEL), jnp.float32),
        "ln2_b": jnp.zeros((1, D_MODEL), jnp.float32),
    }


# ---------------------------------------------------------------------------
# Full AttentionFusion forward (mask/concat glue in JAX, transformer block in one
# Pallas call).  The batch is collapsed into a single (B*L, D) slab; batch
# isolation in attention is enforced by a block-diagonal additive mask
# (off-block = -1e9 -> exp() underflows to exactly 0 in f32).
# ---------------------------------------------------------------------------
def attention_fusion_forward(params, label_feats, lang_feats, lang_attention_mask,
                             visn_feats, visn_attention_mask):
    text_length = lang_feats.shape[1]
    B = lang_feats.shape[0]

    # --- mask preprocessing (mirrors the PyTorch glue exactly) ---
    lang_ext = (1.0 - lang_attention_mask[:, None, :, :].astype(jnp.float32)) * -10000.0
    lang_ext = jnp.mean(lang_ext, axis=2, keepdims=True)            # (B,1,1,M_lang)
    visn_ext = (1.0 - visn_attention_mask[:, None, None, :].astype(jnp.float32)) * -10000.0

    visn_mean = jnp.mean(visn_feats, axis=1)                        # (B, L_visn, D)
    att = jnp.concatenate([lang_feats, visn_mean, label_feats], axis=1)  # (B, L, D)
    L = att.shape[1]

    mask_cat = jnp.concatenate([lang_ext, visn_ext], axis=-1)       # (B,1,1,M_lang+L_visn)
    # narrow(dim=3, 0, L) + expand(-1,-1,L,L) == broadcast of this per-key row
    mask_vec = mask_cat[:, 0, 0, :L]                                # (B, L)

    # dropout on att_output is identity (eval mode)

    S = B * L
    x_flat = att.reshape(S, D_MODEL)
    batch_id = jnp.repeat(jnp.arange(B), L)
    same = batch_id[:, None] == batch_id[None, :]                   # (S, S) block diagonal
    mask_full = jnp.where(same, mask_vec.reshape(S)[None, :], -1e9).astype(jnp.float32)

    # --- single TransformerBlock (n_layers = 1), fully fused Pallas kernel ---
    x, y = fused_transformer_block(x_flat, mask_full, params, B, L, text_length)
    return x, y


if __name__ == "__main__":
    B = 2
    L_LANG, L_VISN, L_LABEL = 8, 4, 4          # L_total = 16
    K_VISN = 2                                  # extra leading dim of visn_feats (mean'd away)
    S_M = 3                                     # extra dim of lang mask (mean'd away)
    M_LANG = L_LANG + L_LABEL                   # lang mask covers lang+label tokens

    key = jax.random.PRNGKey(0)
    k_lab, k_lang, k_visn, k_lm, k_vm, k_par = jax.random.split(key, 6)

    label_feats = jax.random.normal(k_lab, (B, L_LABEL, D_MODEL), jnp.float32)
    lang_feats = jax.random.normal(k_lang, (B, L_LANG, D_MODEL), jnp.float32)
    visn_feats = jax.random.normal(k_visn, (B, K_VISN, L_VISN, D_MODEL), jnp.float32)
    lang_attention_mask = jax.random.bernoulli(k_lm, 0.9, (B, S_M, M_LANG)).astype(jnp.float32)
    visn_attention_mask = jax.random.bernoulli(k_vm, 0.9, (B, L_VISN)).astype(jnp.float32)

    params = init_params(k_par)

    fwd = jax.jit(attention_fusion_forward)
    x, y = fwd(params, label_feats, lang_feats, lang_attention_mask,
               visn_feats, visn_attention_mask)
    jax.block_until_ready((x, y))

    assert x.shape == (B, D_MODEL) and y.shape == (B, D_MODEL)
    assert bool(jnp.all(jnp.isfinite(x))) and bool(jnp.all(jnp.isfinite(y)))
    print("KERNEL_OK")
</pallas_src>

<mosaic_0001>
module attributes {stable_mosaic.version = 11 : i64} {
  func.func @kernel(%arg0: memref<32x768xf32, #tpu.memory_space<vmem>>, %arg1: memref<32x32xf32, #tpu.memory_space<vmem>>, %arg2: memref<768x2304xi8, #tpu.memory_space<vmem>>, %arg3: memref<1x2304xf32, #tpu.memory_space<vmem>>, %arg4: memref<768x768xi8, #tpu.memory_space<vmem>>, %arg5: memref<1x768xf32, #tpu.memory_space<vmem>>, %arg6: memref<1x768xf32, #tpu.memory_space<vmem>>, %arg7: memref<1x768xf32, #tpu.memory_space<vmem>>, %arg8: memref<768x3072xi8, #tpu.memory_space<vmem>>, %arg9: memref<1x3072xf32, #tpu.memory_space<vmem>>, %arg10: memref<1x3072xf32, #tpu.memory_space<vmem>>, %arg11: memref<3072x768xi8, #tpu.memory_space<vmem>>, %arg12: memref<1x768xf32, #tpu.memory_space<vmem>>, %arg13: memref<1x768xf32, #tpu.memory_space<vmem>>, %arg14: memref<1x768xf32, #tpu.memory_space<vmem>>, %arg15: memref<1x768xf32, #tpu.memory_space<vmem>>, %arg16: memref<2x768xf32, #tpu.memory_space<vmem>>, %arg17: memref<2x768xf32, #tpu.memory_space<vmem>>) attributes {dimension_semantics = [], scalar_prefetch = 0 : i64, scratch_operands = 0 : i64, tpu.core_type = #tpu.core_type<tc>} {
    %c0 = arith.constant 0 : index
    %c0_0 = arith.constant 0 : index
    %0 = vector.load %arg0[%c0, %c0_0] : memref<32x768xf32, #tpu.memory_space<vmem>>, vector<32x768xf32>
    %c0_1 = arith.constant 0 : index
    %c0_2 = arith.constant 0 : index
    %1 = vector.load %arg1[%c0_1, %c0_2] : memref<32x32xf32, #tpu.memory_space<vmem>>, vector<32x32xf32>
    %c0_3 = arith.constant 0 : index
    %c0_4 = arith.constant 0 : index
    %2 = vector.load %arg2[%c0_3, %c0_4] : memref<768x2304xi8, #tpu.memory_space<vmem>>, vector<768x2304xi8>
    %3 = arith.sitofp %2 : vector<768x2304xi8> to vector<768x2304xf32>
    %cst = arith.constant dense<0.000000e+00> : vector<32x2304xf32>
    %4 = tpu.matmul %0, %3, %cst {dimension_numbers = #tpu.dot_dimension_numbers<[1], [0], [0], [1], [0, 0, 1, 1], [], []>} : vector<32x768xf32>, vector<768x2304xf32>, vector<32x2304xf32> -> vector<32x2304xf32>
    %c0_5 = arith.constant 0 : index
    %c0_6 = arith.constant 0 : index
    %5 = vector.load %arg3[%c0_5, %c0_6] : memref<1x2304xf32, #tpu.memory_space<vmem>>, vector<1x2304xf32>
    %6 = vector.broadcast %5 : vector<1x2304xf32> to vector<32x2304xf32>
    %7 = arith.mulf %4, %6 : vector<32x2304xf32>
    %8 = vector.extract_strided_slice %7 {offsets = [0, 0], sizes = [32, 768], strides = [1, 1]} : vector<32x2304xf32> to vector<32x768xf32>
    %9 = vector.extract_strided_slice %7 {offsets = [0, 768], sizes = [32, 768], strides = [1, 1]} : vector<32x2304xf32> to vector<32x768xf32>
    %10 = vector.extract_strided_slice %7 {offsets = [0, 1536], sizes = [32, 768], strides = [1, 1]} : vector<32x2304xf32> to vector<32x768xf32>
    %cst_7 = arith.constant dense<0.000000e+00> : vector<32x32xf32>
    %11 = tpu.matmul %8, %9, %cst_7 {dimension_numbers = #tpu.dot_dimension_numbers<[1], [1], [0], [0], [0, 0, 1, 0], [], []>} : vector<32x768xf32>, vector<32x768xf32>, vector<32x32xf32> -> vector<32x32xf32>
    %12 = arith.addf %11, %1 : vector<32x32xf32>
    %cst_8 = arith.constant dense<0xFF800000> : vector<32xf32>
    %13 = vector.multi_reduction <maximumf>, %12, %cst_8 [1] : vector<32x32xf32> to vector<32xf32>
    %14 = vector.shape_cast %13 : vector<32xf32> to vector<32x1xf32>
    %15 = vector.broadcast %14 : vector<32x1xf32> to vector<32x32xf32>
    %16 = arith.subf %12, %15 : vector<32x32xf32>
    %17 = math.exp %16 : vector<32x32xf32>
    %cst_9 = arith.constant dense<0.000000e+00> : vector<32xf32>
    %18 = vector.multi_reduction <add>, %17, %cst_9 [1] : vector<32x32xf32> to vector<32xf32>
    %19 = vector.shape_cast %18 : vector<32xf32> to vector<32x1xf32>
    %20 = tpu.reciprocal %19 {approx = true} : vector<32x1xf32> -> vector<32x1xf32>
    %21 = vector.broadcast %20 : vector<32x1xf32> to vector<32x32xf32>
    %22 = arith.mulf %17, %21 : vector<32x32xf32>
    %cst_10 = arith.constant dense<0.000000e+00> : vector<32x768xf32>
    %23 = tpu.matmul %22, %10, %cst_10 {dimension_numbers = #tpu.dot_dimension_numbers<[1], [0], [0], [1], [0, 0, 1, 1], [], []>} : vector<32x32xf32>, vector<32x768xf32>, vector<32x768xf32> -> vector<32x768xf32>
    %c0_11 = arith.constant 0 : index
    %c0_12 = arith.constant 0 : index
    %24 = vector.load %arg4[%c0_11, %c0_12] : memref<768x768xi8, #tpu.memory_space<vmem>>, vector<768x768xi8>
    %25 = arith.sitofp %24 : vector<768x768xi8> to vector<768x768xf32>
    %cst_13 = arith.constant dense<0.000000e+00> : vector<32x768xf32>
    %26 = tpu.matmul %23, %25, %cst_13 {dimension_numbers = #tpu.dot_dimension_numbers<[1], [0], [0], [1], [0, 0, 1, 1], [], []>} : vector<32x768xf32>, vector<768x768xf32>, vector<32x768xf32> -> vector<32x768xf32>
    %c0_14 = arith.constant 0 : index
    %c0_15 = arith.constant 0 : index
    %27 = vector.load %arg5[%c0_14, %c0_15] : memref<1x768xf32, #tpu.memory_space<vmem>>, vector<1x768xf32>
    %28 = vector.broadcast %27 : vector<1x768xf32> to vector<32x768xf32>
    %29 = arith.mulf %26, %28 : vector<32x768xf32>
    %30 = arith.addf %0, %29 : vector<32x768xf32>
    %c0_16 = arith.constant 0 : index
    %c0_17 = arith.constant 0 : index
    %31 = vector.load %arg6[%c0_16, %c0_17] : memref<1x768xf32, #tpu.memory_space<vmem>>, vector<1x768xf32>
    %c0_18 = arith.constant 0 : index
    %c0_19 = arith.constant 0 : index
    %32 = vector.load %arg7[%c0_18, %c0_19] : memref<1x768xf32, #tpu.memory_space<vmem>>, vector<1x768xf32>
    %cst_20 = arith.constant dense<0.000000e+00> : vector<32xf32>
    %33 = vector.multi_reduction <add>, %30, %cst_20 [1] : vector<32x768xf32> to vector<32xf32>
    %34 = vector.shape_cast %33 : vector<32xf32> to vector<32x1xf32>
    %cst_21 = arith.constant 7.680000e+02 : f32
    %35 = vector.broadcast %cst_21 : f32 to vector<32x1xf32>
    %36 = arith.divf %34, %35 : vector<32x1xf32>
    %37 = vector.broadcast %36 : vector<32x1xf32> to vector<32x768xf32>
    %38 = arith.subf %30, %37 : vector<32x768xf32>
    %39 = arith.mulf %38, %38 : vector<32x768xf32>
    %cst_22 = arith.constant dense<0.000000e+00> : vector<32xf32>
    %40 = vector.multi_reduction <add>, %39, %cst_22 [1] : vector<32x768xf32> to vector<32xf32>
    %41 = vector.shape_cast %40 : vector<32xf32> to vector<32x1xf32>
    %cst_23 = arith.constant 7.680000e+02 : f32
    %42 = vector.broadcast %cst_23 : f32 to vector<32x1xf32>
    %43 = arith.divf %41, %42 : vector<32x1xf32>
    %44 = vector.broadcast %36 : vector<32x1xf32> to vector<32x768xf32>
    %45 = arith.subf %30, %44 : vector<32x768xf32>
    %cst_24 = arith.constant 9.99999997E-7 : f32
    %46 = vector.broadcast %cst_24 : f32 to vector<32x1xf32>
    %47 = arith.addf %43, %46 : vector<32x1xf32>
    %48 = math.rsqrt %47 : vector<32x1xf32>
    %49 = vector.broadcast %48 : vector<32x1xf32> to vector<32x768xf32>
    %50 = arith.mulf %45, %49 : vector<32x768xf32>
    %51 = vector.broadcast %31 : vector<1x768xf32> to vector<32x768xf32>
    %52 = arith.mulf %50, %51 : vector<32x768xf32>
    %53 = vector.broadcast %32 : vector<1x768xf32> to vector<32x768xf32>
    %54 = arith.addf %52, %53 : vector<32x768xf32>
    %cst_25 = arith.constant 0.000000e+00 : f32
    %55 = vector.broadcast %cst_25 : f32 to vector<32x768xf32>
    %c0_26 = arith.constant 0 : index
    %c0_27 = arith.constant 0 : index
    %56 = vector.load %arg8[%c0_26, %c0_27] : memref<768x3072xi8, #tpu.memory_space<vmem>>, vector<768x1024xi8>
    %57 = arith.sitofp %56 : vector<768x1024xi8> to vector<768x1024xf32>
    %cst_28 = arith.constant dense<0.000000e+00> : vector<32x1024xf32>
    %58 = tpu.matmul %54, %57, %cst_28 {dimension_numbers = #tpu.dot_dimension_numbers<[1], [0], [0], [1], [0, 0, 1, 1], [], []>} : vector<32x768xf32>, vector<768x1024xf32>, vector<32x1024xf32> -> vector<32x1024xf32>
    %c0_29 = arith.constant 0 : index
    %c0_30 = arith.constant 0 : index
    %59 = vector.load %arg9[%c0_29, %c0_30] : memref<1x3072xf32, #tpu.memory_space<vmem>>, vector<1x1024xf32>
    %60 = vector.broadcast %59 : vector<1x1024xf32> to vector<32x1024xf32>
    %61 = arith.mulf %58, %60 : vector<32x1024xf32>
    %c0_31 = arith.constant 0 : index
    %c0_32 = arith.constant 0 : index
    %62 = vector.load %arg10[%c0_31, %c0_32] : memref<1x3072xf32, #tpu.memory_space<vmem>>, vector<1x1024xf32>
    %63 = vector.broadcast %62 : vector<1x1024xf32> to vector<32x1024xf32>
    %64 = arith.addf %61, %63 : vector<32x1024xf32>
    %cst_33 = arith.constant 0.000000e+00 : f32
    %65 = vector.broadcast %cst_33 : f32 to vector<32x1024xf32>
    %66 = arith.maximumf %64, %65 : vector<32x1024xf32>
    %c0_34 = arith.constant 0 : index
    %c0_35 = arith.constant 0 : index
    %67 = vector.load %arg11[%c0_34, %c0_35] : memref<3072x768xi8, #tpu.memory_space<vmem>>, vector<1024x768xi8>
    %68 = arith.sitofp %67 : vector<1024x768xi8> to vector<1024x768xf32>
    %cst_36 = arith.constant dense<0.000000e+00> : vector<32x768xf32>
    %69 = tpu.matmul %66, %68, %cst_36 {dimension_numbers = #tpu.dot_dimension_numbers<[1], [0], [0], [1], [0, 0, 1, 1], [], []>} : vector<32x1024xf32>, vector<1024x768xf32>, vector<32x768xf32> -> vector<32x768xf32>
    %70 = arith.addf %55, %69 : vector<32x768xf32>
    %c0_37 = arith.constant 0 : index
    %c1024 = arith.constant 1024 : index
    %71 = vector.load %arg8[%c0_37, %c1024] : memref<768x3072xi8, #tpu.memory_space<vmem>>, vector<768x1024xi8>
    %72 = arith.sitofp %71 : vector<768x1024xi8> to vector<768x1024xf32>
    %cst_38 = arith.constant dense<0.000000e+00> : vector<32x1024xf32>
    %73 = tpu.matmul %54, %72, %cst_38 {dimension_numbers = #tpu.dot_dimension_numbers<[1], [0], [0], [1], [0, 0, 1, 1], [], []>} : vector<32x768xf32>, vector<768x1024xf32>, vector<32x1024xf32> -> vector<32x1024xf32>
    %c0_39 = arith.constant 0 : index
    %c1024_40 = arith.constant 1024 : index
    %74 = vector.load %arg9[%c0_39, %c1024_40] : memref<1x3072xf32, #tpu.memory_space<vmem>>, vector<1x1024xf32>
    %75 = vector.broadcast %74 : vector<1x1024xf32> to vector<32x1024xf32>
    %76 = arith.mulf %73, %75 : vector<32x1024xf32>
    %c0_41 = arith.constant 0 : index
    %c1024_42 = arith.constant 1024 : index
    %77 = vector.load %arg10[%c0_41, %c1024_42] : memref<1x3072xf32, #tpu.memory_space<vmem>>, vector<1x1024xf32>
    %78 = vector.broadcast %77 : vector<1x1024xf32> to vector<32x1024xf32>
    %79 = arith.addf %76, %78 : vector<32x1024xf32>
    %cst_43 = arith.constant 0.000000e+00 : f32
    %80 = vector.broadcast %cst_43 : f32 to vector<32x1024xf32>
    %81 = arith.maximumf %79, %80 : vector<32x1024xf32>
    %c1024_44 = arith.constant 1024 : index
    %c0_45 = arith.constant 0 : index
    %82 = vector.load %arg11[%c1024_44, %c0_45] : memref<3072x768xi8, #tpu.memory_space<vmem>>, vector<1024x768xi8>
    %83 = arith.sitofp %82 : vector<1024x768xi8> to vector<1024x768xf32>
    %cst_46 = arith.constant dense<0.000000e+00> : vector<32x768xf32>
    %84 = tpu.matmul %81, %83, %cst_46 {dimension_numbers = #tpu.dot_dimension_numbers<[1], [0], [0], [1], [0, 0, 1, 1], [], []>} : vector<32x1024xf32>, vector<1024x768xf32>, vector<32x768xf32> -> vector<32x768xf32>
    %85 = arith.addf %70, %84 : vector<32x768xf32>
    %c0_47 = arith.constant 0 : index
    %c2048 = arith.constant 2048 : index
    %86 = vector.load %arg8[%c0_47, %c2048] : memref<768x3072xi8, #tpu.memory_space<vmem>>, vector<768x1024xi8>
    %87 = arith.sitofp %86 : vector<768x1024xi8> to vector<768x1024xf32>
    %cst_48 = arith.constant dense<0.000000e+00> : vector<32x1024xf32>
    %88 = tpu.matmul %54, %87, %cst_48 {dimension_numbers = #tpu.dot_dimension_numbers<[1], [0], [0], [1], [0, 0, 1, 1], [], []>} : vector<32x768xf32>, vector<768x1024xf32>, vector<32x1024xf32> -> vector<32x1024xf32>
    %c0_49 = arith.constant 0 : index
    %c2048_50 = arith.constant 2048 : index
    %89 = vector.load %arg9[%c0_49, %c2048_50] : memref<1x3072xf32, #tpu.memory_space<vmem>>, vector<1x1024xf32>
    %90 = vector.broadcast %89 : vector<1x1024xf32> to vector<32x1024xf32>
    %91 = arith.mulf %88, %90 : vector<32x1024xf32>
    %c0_51 = arith.constant 0 : index
    %c2048_52 = arith.constant 2048 : index
    %92 = vector.load %arg10[%c0_51, %c2048_52] : memref<1x3072xf32, #tpu.memory_space<vmem>>, vector<1x1024xf32>
    %93 = vector.broadcast %92 : vector<1x1024xf32> to vector<32x1024xf32>
    %94 = arith.addf %91, %93 : vector<32x1024xf32>
    %cst_53 = arith.constant 0.000000e+00 : f32
    %95 = vector.broadcast %cst_53 : f32 to vector<32x1024xf32>
    %96 = arith.maximumf %94, %95 : vector<32x1024xf32>
    %c2048_54 = arith.constant 2048 : index
    %c0_55 = arith.constant 0 : index
    %97 = vector.load %arg11[%c2048_54, %c0_55] : memref<3072x768xi8, #tpu.memory_space<vmem>>, vector<1024x768xi8>
    %98 = arith.sitofp %97 : vector<1024x768xi8> to vector<1024x768xf32>
    %cst_56 = arith.constant dense<0.000000e+00> : vector<32x768xf32>
    %99 = tpu.matmul %96, %98, %cst_56 {dimension_numbers = #tpu.dot_dimension_numbers<[1], [0], [0], [1], [0, 0, 1, 1], [], []>} : vector<32x1024xf32>, vector<1024x768xf32>, vector<32x768xf32> -> vector<32x768xf32>
    %100 = arith.addf %85, %99 : vector<32x768xf32>
    %c0_57 = arith.constant 0 : index
    %c0_58 = arith.constant 0 : index
    %101 = vector.load %arg12[%c0_57, %c0_58] : memref<1x768xf32, #tpu.memory_space<vmem>>, vector<1x768xf32>
    %102 = vector.broadcast %101 : vector<1x768xf32> to vector<32x768xf32>
    %103 = arith.mulf %100, %102 : vector<32x768xf32>
    %c0_59 = arith.constant 0 : index
    %c0_60 = arith.constant 0 : index
    %104 = vector.load %arg13[%c0_59, %c0_60] : memref<1x768xf32, #tpu.memory_space<vmem>>, vector<1x768xf32>
    %105 = vector.broadcast %104 : vector<1x768xf32> to vector<32x768xf32>
    %106 = arith.addf %103, %105 : vector<32x768xf32>
    %107 = arith.addf %54, %106 : vector<32x768xf32>
    %c0_61 = arith.constant 0 : index
    %c0_62 = arith.constant 0 : index
    %108 = vector.load %arg14[%c0_61, %c0_62] : memref<1x768xf32, #tpu.memory_space<vmem>>, vector<1x768xf32>
    %c0_63 = arith.constant 0 : index
    %c0_64 = arith.constant 0 : index
    %109 = vector.load %arg15[%c0_63, %c0_64] : memref<1x768xf32, #tpu.memory_space<vmem>>, vector<1x768xf32>
    %cst_65 = arith.constant dense<0.000000e+00> : vector<32xf32>
    %110 = vector.multi_reduction <add>, %107, %cst_65 [1] : vector<32x768xf32> to vector<32xf32>
    %111 = vector.shape_cast %110 : vector<32xf32> to vector<32x1xf32>
    %cst_66 = arith.constant 7.680000e+02 : f32
    %112 = vector.broadcast %cst_66 : f32 to vector<32x1xf32>
    %113 = arith.divf %111, %112 : vector<32x1xf32>
    %114 = vector.broadcast %113 : vector<32x1xf32> to vector<32x768xf32>
    %115 = arith.subf %107, %114 : vector<32x768xf32>
    %116 = arith.mulf %115, %115 : vector<32x768xf32>
    %cst_67 = arith.constant dense<0.000000e+00> : vector<32xf32>
    %117 = vector.multi_reduction <add>, %116, %cst_67 [1] : vector<32x768xf32> to vector<32xf32>
    %118 = vector.shape_cast %117 : vector<32xf32> to vector<32x1xf32>
    %cst_68 = arith.constant 7.680000e+02 : f32
    %119 = vector.broadcast %cst_68 : f32 to vector<32x1xf32>
    %120 = arith.divf %118, %119 : vector<32x1xf32>
    %121 = vector.broadcast %113 : vector<32x1xf32> to vector<32x768xf32>
    %122 = arith.subf %107, %121 : vector<32x768xf32>
    %cst_69 = arith.constant 9.99999997E-7 : f32
    %123 = vector.broadcast %cst_69 : f32 to vector<32x1xf32>
    %124 = arith.addf %120, %123 : vector<32x1xf32>
    %125 = math.rsqrt %124 : vector<32x1xf32>
    %126 = vector.broadcast %125 : vector<32x1xf32> to vector<32x768xf32>
    %127 = arith.mulf %122, %126 : vector<32x768xf32>
    %128 = vector.broadcast %108 : vector<1x768xf32> to vector<32x768xf32>
    %129 = arith.mulf %127, %128 : vector<32x768xf32>
    %130 = vector.broadcast %109 : vector<1x768xf32> to vector<32x768xf32>
    %131 = arith.addf %129, %130 : vector<32x768xf32>
    %132 = vector.extract_strided_slice %131 {offsets = [0, 0], sizes = [1, 768], strides = [1, 1]} : vector<32x768xf32> to vector<1x768xf32>
    %133 = vector.extract_strided_slice %131 {offsets = [16, 0], sizes = [1, 768], strides = [1, 1]} : vector<32x768xf32> to vector<1x768xf32>
    %134 = tpu.concatenate %132, %133 in 0 : vector<1x768xf32>, vector<1x768xf32> -> vector<2x768xf32>
    %c0_70 = arith.constant 0 : index
    %c0_71 = arith.constant 0 : index
    %135 = vector.load %arg16[%c0_70, %c0_71] : memref<2x768xf32, #tpu.memory_space<vmem>>, vector<2x768xf32>
    tpu.vector_store %arg16[%c0_70, %c0_71], %134 {strides = array<i32>} : memref<2x768xf32, #tpu.memory_space<vmem>>, vector<2x768xf32>,
    %136 = vector.extract_strided_slice %131 {offsets = [8, 0], sizes = [1, 768], strides = [1, 1]} : vector<32x768xf32> to vector<1x768xf32>
    %137 = vector.extract_strided_slice %131 {offsets = [24, 0], sizes = [1, 768], strides = [1, 1]} : vector<32x768xf32> to vector<1x768xf32>
    %138 = tpu.concatenate %136, %137 in 0 : vector<1x768xf32>, vector<1x768xf32> -> vector<2x768xf32>
    %c0_72 = arith.constant 0 : index
    %c0_73 = arith.constant 0 : index
    %139 = vector.load %arg17[%c0_72, %c0_73] : memref<2x768xf32, #tpu.memory_space<vmem>>, vector<2x768xf32>
    tpu.vector_store %arg17[%c0_72, %c0_73], %138 {strides = array<i32>} : memref<2x768xf32, #tpu.memory_space<vmem>>, vector<2x768xf32>,
    return
  }
}

</mosaic_0001>

<llo_original>
// kernel: eq.8
$region0: #{eq.8}
  %s0 = inlined_call_operand.vmem [shape: s32[2,16], index: 0, kind: input, shape index: {}]
  %s1 = inlined_call_operand.vmem [shape: s32[32], index: 1, kind: output, shape index: {}]
  $region1: #{eq.8} parent=0
    #allocation0 [shape = 'u8[4096]{0}', space=vmem, size = 0x1000, scoped, tag = 'scoped mem for output reshape']
    #allocation1 [shape = 'u8[4096]{0}', space=vmem, size = 0x1000, scoped, tag = 'scoped mem for input reshape']
    %s3 = sshll.u32 1, 2
    %s4 = ssub.s32 %s3, 1
    %v5 = vld [vmem:[%s0] sm:%s4]
    %6 = vst [vmem:[#allocation1] sm:%s4] %v5
    %v7 = vld [vmem:[#allocation1] sm:$0x1]
    %vm8 = vcmask 130048
    %9 = vst.msk [vmem:[#allocation0] sm:$0x1] %vm8, %v7
    %s10 = scalar_lea.vmem [#allocation1], 1
    %v11 = vld [vmem:[%s10] sm:$0x1]
    %12 = vrot.lane.b32.xlu0 %v11, 16
    %v13 = vpop.permute.xlu0 %12
    %vm14 = vcmask 261248
    %15 = vst.msk [vmem:[#allocation0] sm:$0x1] %vm14, %v13
    %s17 = sshll.u32 1, 1
    %s18 = ssub.s32 %s17, 1
    %v20 = vld [vmem:[#allocation0] sm:%s18]
    %s21 = sshll.u32 1, 1
    %s22 = ssub.s32 %s21, 1
    %23 = vst [vmem:[%s1] sm:%s22] %v20

</llo_original>
